<compile_context>
chip_gen: v7x
topology: tpu7x:2x2x1
jax: 0.10.0
libtpu: 0.0.40
codegen_flags: <defaults>
</compile_context>

<pallas_src>
import functools
import math

import numpy as np
import jax
import jax.numpy as jnp
from jax.experimental import pallas as pl
from jax.experimental.pallas import tpu as pltpu


# ---------------------------------------------------------------------------
# tiling helpers
# ---------------------------------------------------------------------------

def _pick_tile(n, candidates=(512, 256, 128, 64, 32, 16, 8)):
    for c in candidates:
        if n % c == 0:
            return c
    return n  # full extent (exempt from the (8,128) tiling rule)


def _pick_tm(m):
    """Largest m-tile, but keep >=2 m-tiles when possible (v7x megacore)."""
    tm = _pick_tile(m)
    if m // tm < 2 and m >= 16:
        half = _pick_tile(m // 2)
        if m % half == 0 and half % 8 == 0:
            tm = half
    return tm


def _mosaic_params(dimension_semantics, *tile_bytes):
    need = 2 * int(sum(tile_bytes))                       # double-buffered pipeline
    limit = int(min(max(2 * need, 32 * 1024 * 1024), 64 * 1024 * 1024))
    return pltpu.CompilerParams(dimension_semantics=dimension_semantics,
                                vmem_limit_bytes=limit)


# ---------------------------------------------------------------------------
# RMSNorm kernel
# ---------------------------------------------------------------------------

def rmsnorm_kernel(x_ref, w_ref, o_ref, *, eps):
    x = x_ref[...].astype(jnp.float32)                    # (tm, H)
    var = jnp.mean(x * x, axis=-1, keepdims=True)
    y = x * jax.lax.rsqrt(var + eps)
    o_ref[...] = (w_ref[...].astype(jnp.float32) * y).astype(o_ref.dtype)


def rmsnorm(x2, weight, eps, *, tm=None):
    m, h = x2.shape
    tm = tm or _pick_tm(m)
    return pl.pallas_call(
        functools.partial(rmsnorm_kernel, eps=eps),
        out_shape=jax.ShapeDtypeStruct((m, h), x2.dtype),
        grid_spec=pltpu.PrefetchScalarGridSpec(
            num_scalar_prefetch=0,
            grid=(m // tm,),
            in_specs=[pl.BlockSpec((tm, h), lambda i: (i, 0)),
                      pl.BlockSpec((1, h), lambda i: (0, 0))],
            out_specs=pl.BlockSpec((tm, h), lambda i: (i, 0)),
        ),
        compiler_params=_mosaic_params(("parallel",),
                                       2 * tm * h * x2.dtype.itemsize, h * 4),
    )(x2, weight.reshape(1, h))


# ---------------------------------------------------------------------------
# K-tiled linear kernel with optional fused residual add
# ---------------------------------------------------------------------------

def linear_kernel(*refs, has_residual):
    if has_residual:
        x_ref, w_ref, res_ref, o_ref, acc_ref = refs
    else:
        x_ref, w_ref, o_ref, acc_ref = refs
        res_ref = None
    k = pl.program_id(1)

    @pl.when(k == 0)
    def _():
        if res_ref is not None:
            acc_ref[...] = res_ref[...].astype(jnp.float32)
        else:
            acc_ref[...] = jnp.zeros_like(acc_ref)

    acc_ref[...] += jnp.dot(x_ref[...], w_ref[...],
                            preferred_element_type=jnp.float32)

    @pl.when(k == pl.num_programs(1) - 1)
    def _():
        o_ref[...] = acc_ref[...].astype(o_ref.dtype)


def linear(x2, w_t, residual=None, *, out_dtype=None, tm=None, tk=None):
    m, kdim = x2.shape
    n = w_t.shape[1]
    tm = tm or _pick_tm(m)
    tk = tk or _pick_tile(kdim, (512, 256, 128))          # lane-aligned K tiles
    if out_dtype is None:
        out_dtype = residual.dtype if residual is not None else x2.dtype

    in_specs = [pl.BlockSpec((tm, tk), lambda i, k: (i, k)),
                pl.BlockSpec((tk, n), lambda i, k: (k, 0))]
    args = [x2, w_t]
    if residual is not None:
        in_specs.append(pl.BlockSpec((tm, n), lambda i, k: (i, 0)))
        args.append(residual)

    itemsize = x2.dtype.itemsize
    return pl.pallas_call(
        functools.partial(linear_kernel, has_residual=residual is not None),
        out_shape=jax.ShapeDtypeStruct((m, n), out_dtype),
        grid_spec=pltpu.PrefetchScalarGridSpec(
            num_scalar_prefetch=0,
            grid=(m // tm, kdim // tk),
            in_specs=in_specs,
            out_specs=pl.BlockSpec((tm, n), lambda i, k: (i, 0)),
            scratch_shapes=[pltpu.VMEM((tm, n), jnp.float32)],
        ),
        compiler_params=_mosaic_params(
            ("parallel", "arbitrary"),
            tm * tk * itemsize, tk * n * itemsize, tm * n * 4,
            tm * n * np.dtype(out_dtype).itemsize),
    )(*args)


# ---------------------------------------------------------------------------
# Attention kernel: one (batch, head) per grid point, full sequence in VMEM
# ---------------------------------------------------------------------------

def attention_kernel(*refs, scale, has_mask):
    if has_mask:
        q_ref, k_ref, v_ref, m_ref, o_ref = refs
    else:
        q_ref, k_ref, v_ref, o_ref = refs
        m_ref = None
    s_len, d = q_ref.shape[2], q_ref.shape[3]
    q = q_ref[...].reshape(s_len, d)
    k = k_ref[...].reshape(s_len, d)
    v = v_ref[...].reshape(s_len, d)

    scores = jax.lax.dot_general(q, k, (((1,), (1,)), ((), ())),
                                 preferred_element_type=jnp.float32) * scale
    if m_ref is not None:
        scores = scores + m_ref[...].reshape(s_len, s_len).astype(jnp.float32)

    smax = jnp.max(scores, axis=-1, keepdims=True)
    p = jnp.exp(scores - smax)
    p = p / jnp.sum(p, axis=-1, keepdims=True)

    o = jnp.dot(p.astype(v.dtype), v, preferred_element_type=jnp.float32)
    o_ref[...] = o.reshape(1, 1, s_len, d).astype(o_ref.dtype)


def attention(q, k, v, mask, scale):
    b, nh, s, d = q.shape
    has_mask = mask is not None
    in_specs = [pl.BlockSpec((1, 1, s, d), lambda bi, hi: (bi, hi, 0, 0))
                for _ in range(3)]
    args = [q, k, v]
    if has_mask:
        mask = jnp.broadcast_to(mask, (b, nh, s, s)).astype(jnp.float32)
        in_specs.append(pl.BlockSpec((1, 1, s, s), lambda bi, hi: (bi, hi, 0, 0)))
        args.append(mask)
    return pl.pallas_call(
        functools.partial(attention_kernel, scale=scale, has_mask=has_mask),
        out_shape=jax.ShapeDtypeStruct((b, nh, s, d), q.dtype),
        grid_spec=pltpu.PrefetchScalarGridSpec(
            num_scalar_prefetch=0,
            grid=(b, nh),
            in_specs=in_specs,
            out_specs=pl.BlockSpec((1, 1, s, d), lambda bi, hi: (bi, hi, 0, 0)),
        ),
        compiler_params=pltpu.CompilerParams(
            dimension_semantics=("parallel", "parallel")),
    )(*args)


# ---------------------------------------------------------------------------
# Fused SwiGLU MLP kernel: down( silu(gate(x)) * up(x) ) + residual
# ---------------------------------------------------------------------------

def mlp_kernel(x_ref, wgu_ref, wd_ref, res_ref, o_ref, *scratch):
    # Accumulate directly in the resident output block when it is f32;
    # otherwise a f32 scratch accumulator is supplied.
    acc_ref = scratch[0] if scratch else o_ref
    i = pl.program_id(1)
    ti = wd_ref.shape[0]

    @pl.when(i == 0)
    def _():
        acc_ref[...] = res_ref[...].astype(acc_ref.dtype)      # fused residual

    gu = jnp.dot(x_ref[...], wgu_ref[...],
                 preferred_element_type=jnp.float32)            # (tm, 2*ti)
    g = gu[:, :ti]
    u = gu[:, ti:]
    a = (g * jax.nn.sigmoid(g)) * u                             # SiLU(g)*u in f32
    acc_ref[...] += jnp.dot(a.astype(wd_ref.dtype), wd_ref[...],
                            preferred_element_type=jnp.float32)

    if scratch:
        @pl.when(i == pl.num_programs(1) - 1)
        def _():
            o_ref[...] = acc_ref[...].astype(o_ref.dtype)


def llama_mlp(x2, gate_w, up_w, down_w, residual, *, compute_dtype=None,
              tm=None, ti=None):
    m, h = x2.shape
    inter = gate_w.shape[0]
    cd = np.dtype(compute_dtype) if compute_dtype is not None else x2.dtype
    tm = tm or _pick_tm(m)
    ti = ti or _pick_tile(inter, (512, 256, 128))
    nb = inter // ti

    wg_t = gate_w.T.astype(cd)
    wu_t = up_w.T.astype(cd)
    wd_t = down_w.T.astype(cd)
    # Fuse gate & up into one stream, grouped block-wise along columns so column
    # block i of the [h, 2*inter] array is [gate cols of block i | up cols of block i].
    wgu = jnp.concatenate([wg_t.reshape(h, nb, ti), wu_t.reshape(h, nb, ti)],
                          axis=2).reshape(h, 2 * inter)
    xc = x2.astype(cd)

    out_dtype = residual.dtype
    use_scratch = np.dtype(out_dtype) != np.dtype(np.float32)
    scratch = [pltpu.VMEM((tm, h), jnp.float32)] if use_scratch else []

    itemsize = np.dtype(cd).itemsize
    return pl.pallas_call(
        mlp_kernel,
        out_shape=jax.ShapeDtypeStruct((m, h), out_dtype),
        grid_spec=pltpu.PrefetchScalarGridSpec(
            num_scalar_prefetch=0,
            grid=(m // tm, inter // ti),
            in_specs=[
                pl.BlockSpec((tm, h), lambda mi, ii: (mi, 0)),       # x tile
                pl.BlockSpec((h, 2 * ti), lambda mi, ii: (0, ii)),   # [gate|up] slice
                pl.BlockSpec((ti, h), lambda mi, ii: (ii, 0)),       # down slice
                pl.BlockSpec((tm, h), lambda mi, ii: (mi, 0)),       # residual
            ],
            out_specs=pl.BlockSpec((tm, h), lambda mi, ii: (mi, 0)),
            scratch_shapes=scratch,
        ),
        compiler_params=_mosaic_params(
            ("parallel", "arbitrary"),
            tm * h * itemsize, h * 2 * ti * itemsize, ti * h * itemsize,
            tm * h * 4, tm * h * np.dtype(out_dtype).itemsize),
    )(xc, wgu, wd_t, residual)


# ---------------------------------------------------------------------------
# RoPE glue (faithful to LlamaRotaryEmbedding / _apply_rotary_pos_emb)
# ---------------------------------------------------------------------------

def _rope_embedding(seq_len, dim, base):
    inv_freq = 1.0 / (base ** (jnp.arange(0, dim, 2, dtype=jnp.float32) / dim))
    pos = jnp.arange(seq_len, dtype=jnp.float32)
    sincos = pos[:, None] * inv_freq[None, :]
    emb = jnp.concatenate([jnp.sin(sincos), jnp.cos(sincos)], axis=-1)
    return emb[None, :, None, :]                       # [1, S, 1, dim]


def _apply_rotary(x, rope):
    xf = x.astype(jnp.float32)
    cos = rope[..., 1::2]
    sin = rope[..., 0::2]
    xe = xf[..., 0::2]
    xo = xf[..., 1::2]
    out = jnp.concatenate([xe * cos - xo * sin, xe * sin + xo * cos], axis=-1)
    return out.astype(x.dtype)


# ---------------------------------------------------------------------------
# Full decoder layer
# ---------------------------------------------------------------------------

def llama_decoder_layer(hidden_states, params, model_config, attention_mask=None,
                        compute_dtype=None):
    b, s, h = hidden_states.shape
    nh = model_config["num_attention_heads"]
    nkv = model_config.get("num_key_value_heads", nh)
    d = h // nh
    eps = model_config.get("rms_norm_eps", 1e-5)
    base = model_config.get("rope_theta", 10000.0)
    cd = np.dtype(compute_dtype) if compute_dtype is not None else hidden_states.dtype

    m = b * s
    x2 = hidden_states.reshape(m, h)

    # ---- self-attention block ----
    h_norm = rmsnorm(x2, params["ln1_w"], eps)

    wqkv = jnp.concatenate([params["wq"].T, params["wk"].T, params["wv"].T],
                           axis=1).astype(cd)                  # [h, h + 2*nkv*d]
    qkv = linear(h_norm.astype(cd), wqkv, out_dtype=cd)
    hq, hkv = h, nkv * d
    q = qkv[:, :hq].reshape(b, s, nh, d)
    k = qkv[:, hq:hq + hkv].reshape(b, s, nkv, d)
    v = qkv[:, hq + hkv:].reshape(b, s, nkv, d)

    # TODO(synk): RoPE application, head reshuffling and GQA repeat are thin jnp
    # glue between the Pallas kernels rather than fused in-kernel.
    rope = _rope_embedding(s, d, base)
    q = _apply_rotary(q, rope)
    k = _apply_rotary(k, rope)
    q = jnp.transpose(q, (0, 2, 1, 3))
    k = jnp.transpose(k, (0, 2, 1, 3))
    v = jnp.transpose(v, (0, 2, 1, 3))
    if nkv != nh:
        rep = nh // nkv
        k = jnp.repeat(k, rep, axis=1)
        v = jnp.repeat(v, rep, axis=1)

    attn = attention(q, k, v, attention_mask, 1.0 / math.sqrt(d))
    attn2 = jnp.transpose(attn, (0, 2, 1, 3)).reshape(m, h).astype(cd)

    # o_proj with the first residual add fused in (output stays f32).
    h1 = linear(attn2, params["wo"].T.astype(cd), residual=x2)

    # ---- MLP block (second residual fused in) ----
    h_norm2 = rmsnorm(h1, params["ln2_w"], eps)
    out2 = llama_mlp(h_norm2, params["wg"], params["wu"], params["wd"],
                     residual=h1, compute_dtype=cd)
    return out2.reshape(b, s, h)


# ---------------------------------------------------------------------------
# Pure-JAX reference (mirrors the PyTorch module exactly)
# ---------------------------------------------------------------------------

def llama_decoder_layer_ref(hidden_states, params, model_config, attention_mask=None):
    b, s, h = hidden_states.shape
    nh = model_config["num_attention_heads"]
    nkv = model_config.get("num_key_value_heads", nh)
    d = h // nh
    eps = model_config.get("rms_norm_eps", 1e-5)
    base = model_config.get("rope_theta", 10000.0)

    def rms(x, w):
        var = jnp.mean(jnp.square(x), axis=-1, keepdims=True)
        return w * (x * jax.lax.rsqrt(var + eps))

    residual = hidden_states
    x = rms(hidden_states, params["ln1_w"])
    q = x @ params["wq"].T
    k = x @ params["wk"].T
    v = x @ params["wv"].T
    q = q.reshape(b, s, nh, d)
    k = k.reshape(b, s, nkv, d)
    v = v.reshape(b, s, nkv, d)
    rope = _rope_embedding(s, d, base)
    q = _apply_rotary(q, rope)
    k = _apply_rotary(k, rope)
    q = jnp.transpose(q, (0, 2, 1, 3))
    k = jnp.transpose(k, (0, 2, 1, 3))
    v = jnp.transpose(v, (0, 2, 1, 3))
    if nkv != nh:
        k = jnp.repeat(k, nh // nkv, axis=1)
        v = jnp.repeat(v, nh // nkv, axis=1)
    scores = jnp.einsum("bhqd,bhkd->bhqk", q, k) / math.sqrt(d)
    if attention_mask is not None:
        scores = scores + attention_mask
    probs = jax.nn.softmax(scores, axis=-1)
    attn = jnp.einsum("bhqk,bhkd->bhqd", probs, v)
    attn = jnp.transpose(attn, (0, 2, 1, 3)).reshape(b, s, h)
    attn = attn @ params["wo"].T
    x = residual + attn
    residual = x
    x = rms(x, params["ln2_w"])
    g = x @ params["wg"].T
    u = x @ params["wu"].T
    mlp = (jax.nn.silu(g) * u) @ params["wd"].T
    return residual + mlp


# ---------------------------------------------------------------------------
# main
# ---------------------------------------------------------------------------

if __name__ == "__main__":
    config = {"model": {"model_config": {
        "hidden_size": 256,
        "intermediate_size": 512,
        "num_attention_heads": 4,
        "num_key_value_heads": 2,
        "max_position_embeddings": 2048,
        "rope_theta": 10000.0,
        "rms_norm_eps": 1e-5,
    }}}
    mc = config["model"]["model_config"]
    B, S = 2, 64
    H, I = mc["hidden_size"], mc["intermediate_size"]
    NH, NKV = mc["num_attention_heads"], mc["num_key_value_heads"]
    D = H // NH

    key = jax.random.PRNGKey(0)
    ks = jax.random.split(key, 10)

    def lin(k, out_f, in_f):
        return jax.random.normal(k, (out_f, in_f), dtype=jnp.float32) / math.sqrt(in_f)

    x = jax.random.normal(ks[0], (B, S, H), dtype=jnp.float32)
    params = {
        "wq": lin(ks[1], H, H),
        "wk": lin(ks[2], NKV * D, H),
        "wv": lin(ks[3], NKV * D, H),
        "wo": lin(ks[4], H, H),
        "wg": lin(ks[5], I, H),
        "wu": lin(ks[6], I, H),
        "wd": lin(ks[7], H, I),
        "ln1_w": 1.0 + 0.1 * jax.random.normal(ks[8], (H,), dtype=jnp.float32),
        "ln2_w": 1.0 + 0.1 * jax.random.normal(ks[9], (H,), dtype=jnp.float32),
    }

    # f32 path, no mask
    out = jax.block_until_ready(llama_decoder_layer(x, params, mc))
    ref = llama_decoder_layer_ref(x, params, mc)
    assert out.shape == (B, S, H) and out.dtype == jnp.float32
    err = float(jnp.max(jnp.abs(out - ref)))
    assert jnp.allclose(out, ref, atol=3e-2, rtol=3e-2), f"f32 mismatch, max err {err}"

    # f32 path with a causal additive mask (exercises the mask branch)
    causal = jnp.where(jnp.tril(jnp.ones((S, S), dtype=bool)), 0.0, -1e9)
    causal = causal[None, None].astype(jnp.float32)
    out_m = jax.block_until_ready(
        llama_decoder_layer(x, params, mc, attention_mask=causal))
    ref_m = llama_decoder_layer_ref(x, params, mc, attention_mask=causal)
    err_m = float(jnp.max(jnp.abs(out_m - ref_m)))
    assert jnp.allclose(out_m, ref_m, atol=3e-2, rtol=3e-2), \
        f"masked mismatch, max err {err_m}"

    # bf16 matmul path (f32 accumulation / softmax / norms), checked loosely
    out_bf16 = jax.block_until_ready(
        llama_decoder_layer(x, params, mc, compute_dtype=jnp.bfloat16))
    err_b = float(jnp.max(jnp.abs(out_bf16 - ref)))
    assert jnp.allclose(out_bf16, ref, atol=2e-1, rtol=2e-1), \
        f"bf16 mismatch, max err {err_b}"

    print("KERNEL_OK")
</pallas_src>

<mosaic_0001>
module attributes {stable_mosaic.version = 11 : i64} {
  func.func @rmsnorm_kernel(%arg0: i32, %arg1: memref<64x256xf32, #tpu.memory_space<vmem>>, %arg2: memref<1x256xf32, #tpu.memory_space<vmem>>, %arg3: memref<64x256xf32, #tpu.memory_space<vmem>>) attributes {dimension_semantics = [#tpu.dimension_semantics<parallel>], iteration_bounds = array<i64: 2>, scalar_prefetch = 0 : i64, scratch_operands = 0 : i64, tpu.core_type = #tpu.core_type<tc>, window_params = [{transform_indices = @transform_0, window_bounds = array<i64: 64, 256>}, {pipeline_mode = #tpu.pipeline_mode<synchronous>, transform_indices = @transform_1, window_bounds = array<i64: 1, 256>}, {transform_indices = @transform_2, window_bounds = array<i64: 64, 256>}]} {
    %c0 = arith.constant 0 : index
    %c0_0 = arith.constant 0 : index
    %0 = vector.load %arg1[%c0, %c0_0] : memref<64x256xf32, #tpu.memory_space<vmem>>, vector<64x256xf32>
    %1 = arith.mulf %0, %0 : vector<64x256xf32>
    %cst = arith.constant dense<0.000000e+00> : vector<64xf32>
    %2 = vector.multi_reduction <add>, %1, %cst [1] : vector<64x256xf32> to vector<64xf32>
    %3 = vector.shape_cast %2 : vector<64xf32> to vector<64x1xf32>
    %cst_1 = arith.constant 2.560000e+02 : f32
    %4 = vector.broadcast %cst_1 : f32 to vector<64x1xf32>
    %5 = arith.divf %3, %4 : vector<64x1xf32>
    %cst_2 = arith.constant 9.99999974E-6 : f32
    %6 = vector.broadcast %cst_2 : f32 to vector<64x1xf32>
    %7 = arith.addf %5, %6 : vector<64x1xf32>
    %8 = math.rsqrt %7 : vector<64x1xf32>
    %9 = vector.broadcast %8 : vector<64x1xf32> to vector<64x256xf32>
    %10 = arith.mulf %0, %9 : vector<64x256xf32>
    %c0_3 = arith.constant 0 : index
    %c0_4 = arith.constant 0 : index
    %11 = vector.load %arg2[%c0_3, %c0_4] : memref<1x256xf32, #tpu.memory_space<vmem>>, vector<1x256xf32>
    %12 = vector.broadcast %11 : vector<1x256xf32> to vector<64x256xf32>
    %13 = arith.mulf %12, %10 : vector<64x256xf32>
    %c0_5 = arith.constant 0 : index
    %c0_6 = arith.constant 0 : index
    %14 = vector.load %arg3[%c0_5, %c0_6] : memref<64x256xf32, #tpu.memory_space<vmem>>, vector<64x256xf32>
    tpu.vector_store %arg3[%c0_5, %c0_6], %13 {strides = array<i32>} : memref<64x256xf32, #tpu.memory_space<vmem>>, vector<64x256xf32>,
    return
  }
  func.func @transform_0(%arg0: i32) -> (i32, i32) {
    %c0_i32 = arith.constant 0 : i32
    %c0_i32_0 = arith.constant 0 : i32
    return %arg0, %c0_i32 : i32, i32
  }
  func.func @transform_1(%arg0: i32) -> (i32, i32) {
    %c0_i32 = arith.constant 0 : i32
    %c0_i32_0 = arith.constant 0 : i32
    %c0_i32_1 = arith.constant 0 : i32
    return %c0_i32, %c0_i32_0 : i32, i32
  }
  func.func @transform_2(%arg0: i32) -> (i32, i32) {
    %c0_i32 = arith.constant 0 : i32
    %c0_i32_0 = arith.constant 0 : i32
    return %arg0, %c0_i32 : i32, i32
  }
}

</mosaic_0001>

<llo_original>
// kernel: tpu_custom_call.1
$region0: #{tpu_custom_call.1}
  #allocation0 [shape = 'u32[]', space=smem, size = 0x4, offset = 0x4, fixed_abs, tag = 'smem constant byte address 0x4 - core index']
  #allocation1 [shape = 'u32[144,128]{1,0:T(1,128)}', space=vmem, size = 0x12000, scoped, tag = 'internal scratch']
  %s0 = inlined_call_operand.hbm [shape: f32[128,256], index: 0, kind: input, shape index: {}]
  %s1 = inlined_call_operand.vmem [shape: f32[1,256], index: 1, kind: input, shape index: {}]
  %s2 = inlined_call_operand.hbm [shape: f32[128,256], index: 2, kind: output, shape index: {}]
  %s3 = sld [smem:[#allocation0]]
  $region45: #{tpu_custom_call.1} parent=0
    _
  %s5 = ssub.s32 1, %s3
  %s6 = scalar_select 0, %s5, %s3
  $region1: #{tpu_custom_call.1} parent=0
    #allocation2 [shape = 'u8[131072]{0}', space=vmem, size = 0x20000, scoped, tag = 'input window, operand 0']
    #allocation3 [shape = 's32[2]{0}', space=sflag, size = 0x8, scoped, tag = 'scoped memory for tpu_custom_call.1']
    #allocation4 [shape = 's32[2]{0}', space=sflag, size = 0x8, scoped, tag = 'scoped memory for tpu_custom_call.1']
    #allocation5 [shape = 'u8[131072]{0}', space=vmem, size = 0x20000, scoped, tag = 'output window, operand 0']
    %7 = vsyncpa [#allocation3], 0
    %s8 = scalar_lea.sflag [#allocation3], 1
    %9 = vsyncpa %s8, 0
    %10 = vsyncpa [#allocation4], 0
    %s11 = scalar_lea.sflag [#allocation4], 1
    %12 = vsyncpa %s11, 0
    loop: start=0, step=1, limit=4
    $region2: #{tpu_custom_call.1} parent=1 // loop_pre_header
      _
    $region3: #{tpu_custom_call.1} parent=1 // loop_header
      %s14 = sphi 0, %s18
      %p15 = scmp.ge.s32.totalorder %s14, 4
      %s24 = sphi 0, %s26
      %s27 = sphi 0, %s24
      %s28 = sphi 0, %s27
      %s44 = sphi 0, %s28
      %s48 = sphi 0, %s48
      %s50 = sphi 0, %s48
      %s51 = sphi 0, %s50
      %s65 = sphi 0, %s51
      %s71 = sphi 0, %s73
      %s74 = sphi 0, %s71
      %s75 = sphi 0, %s74
      %s91 = sphi 0, %s75
    $region4: #{tpu_custom_call.1} parent=1 // loop_header_branch
      %17 = sbr.rel (%p15) target = $region8
    $region5: #{tpu_custom_call.1} parent=1 // loop_body
      %s19 = ssub.s32 %s14, 1
      %s20 = ssub.s32 %s14, 2
      %s21 = sadd.s32 %s14, 1
      %s22 = ssub.s32 %s14, %s21
      %p23 = scmp.eq.s32.totalorder %s22, 0
      %s25 = sadd.s32 %s24, 1
      %s26 = scalar_select %p23, %s24, %s25
      %p29 = pneg %p23
      %p30 = scmp.eq.s32.totalorder %s14, 1
      %p31 = por %p29, %p30
      %p32 = scmp.ne.s32.totalorder %s24, %s27
      %p33 = scmp.eq.s32.totalorder %s14, 0
      %p34 = por %p32, %p33
      %p35 = scmp.ne.s32.totalorder %s24, %s27
      %p36 = scmp.eq.s32.totalorder %s19, 1
      %p37 = por %p35, %p36
      %p38 = scmp.ne.s32.totalorder %s27, %s28
      %p39 = scmp.eq.s32.totalorder %s19, 0
      %p40 = por %p38, %p39
      %p41 = scmp.ne.s32.totalorder %s27, %s28
      %p42 = scmp.eq.s32.totalorder %s20, 1
      %p43 = por %p41, %p42
      %p45 = scmp.ne.s32.totalorder %s28, %s44
      %p46 = scmp.eq.s32.totalorder %s20, 0
      %p47 = por %p45, %p46
      %s49 = sadd.s32 %s48, 1
      %p52 = scmp.eq.s32.totalorder %s14, 1
      %p53 = scmp.ne.s32.totalorder %s48, %s50
      %p54 = scmp.eq.s32.totalorder %s14, 0
      %p55 = por %p53, %p54
      %p56 = scmp.ne.s32.totalorder %s48, %s50
      %p57 = scmp.eq.s32.totalorder %s19, 1
      %p58 = por %p56, %p57
      %p59 = scmp.ne.s32.totalorder %s50, %s51
      %p60 = scmp.eq.s32.totalorder %s19, 0
      %p61 = por %p59, %p60
      %p62 = scmp.ne.s32.totalorder %s50, %s51
      %p63 = scmp.eq.s32.totalorder %s20, 1
      %p64 = por %p62, %p63
      %p66 = scmp.ne.s32.totalorder %s51, %s65
      %p67 = scmp.eq.s32.totalorder %s20, 0
      %p68 = por %p66, %p67
      %s69 = ssub.s32 %s14, %s21
      %p70 = scmp.eq.s32.totalorder %s69, 0
      %s72 = sadd.s32 %s71, 1
      %s73 = scalar_select %p70, %s71, %s72
      %p76 = pneg %p70
      %p77 = scmp.eq.s32.totalorder %s14, 1
      %p78 = por %p76, %p77
      %p79 = scmp.ne.s32.totalorder %s71, %s74
      %p80 = scmp.eq.s32.totalorder %s14, 0
      %p81 = por %p79, %p80
      %p82 = scmp.ne.s32.totalorder %s71, %s74
      %p83 = scmp.eq.s32.totalorder %s19, 1
      %p84 = por %p82, %p83
      %p85 = scmp.ne.s32.totalorder %s74, %s75
      %p86 = scmp.eq.s32.totalorder %s19, 0
      %p87 = por %p85, %p86
      %p88 = scmp.ne.s32.totalorder %s74, %s75
      %p89 = scmp.eq.s32.totalorder %s20, 1
      %p90 = por %p88, %p89
      %p92 = scmp.ne.s32.totalorder %s75, %s91
      %p93 = scmp.eq.s32.totalorder %s20, 0
      %p94 = por %p92, %p93
      %p95 = scmp.le.s32.totalorder 1, %s14
      %p96 = scmp.lt.s32.totalorder %s14, 3
      %p97 = pnand %p95, %p96
      %p98 = pneg %p97
      // Predicated region
      $region9: #{tpu_custom_call.1} parent=5 // pred_check
        _
      $region10: #{tpu_custom_call.1} parent=5 // pred_check_branch
        %100 = sbr.rel (%p97) target = $region12
      $region11: #{tpu_custom_call.1} parent=5 // pred_region
        %s101 = ssub.s32 %s14, 1
        // Predicated region
        $region13: #{tpu_custom_call.1} parent=11 // pred_check
          %p102 = pneg %p61
        $region14: #{tpu_custom_call.1} parent=11 // pred_check_branch
          %104 = sbr.rel (%p102) target = $region16
        $region15: #{tpu_custom_call.1} parent=11 // pred_region
          _
        $region16: #{tpu_custom_call.1} parent=11 // pred_fallthru
          _
      $region12: #{tpu_custom_call.1} parent=5 // pred_fallthru
        _
      %p105 = scmp.lt.s32.totalorder %s14, 2
      // Predicated region
      $region17: #{tpu_custom_call.1} parent=5 // pred_check
        %p106 = pneg %p105
      $region18: #{tpu_custom_call.1} parent=5 // pred_check_branch
        %108 = sbr.rel (%p106) target = $region20
      $region19: #{tpu_custom_call.1} parent=5 // pred_region
        // Predicated region
        $region21: #{tpu_custom_call.1} parent=19 // pred_check
          %p109 = pneg %p34
        $region22: #{tpu_custom_call.1} parent=19 // pred_check_branch
          %111 = sbr.rel (%p109) target = $region24
        $region23: #{tpu_custom_call.1} parent=19 // pred_region
          %s112 = sand.u32 %s24, 1
          %s113 = scalar_lea.sflag [#allocation3], %s112
          %s114 = sand.u32 %s24, 1
          %s115 = smul.addr %s114, 128
          %s116 = scalar_lea.vmem [#allocation2], %s115
          %s117 = smul.u32 8, %s14
          %s119 = ssub.s32 2048, 2048
          %120 = vsyncadd %s113, %s119
          %s121 = smul.addr %s117, 2
          %s122 = smul.addr %s121, 128
          %s123 = scalar_lea.hbm %s0, %s122
          %s124 = sshll.u32 %s116, 4
          %s125 = int_to_ptr.vmem [resolvable:$true] %s124
          %130 = dma.hbm_to_vmem [thread:$0]  %s123, 2048, %s125, %s113, 256, 256, 16
        $region24: #{tpu_custom_call.1} parent=19 // pred_fallthru
          _
      $region20: #{tpu_custom_call.1} parent=5 // pred_fallthru
        _
      %p131 = scmp.le.s32.totalorder 1, %s14
      %p132 = scmp.lt.s32.totalorder %s14, 3
      %p133 = pnand %p131, %p132
      %p134 = pneg %p133
      // Predicated region
      $region25: #{tpu_custom_call.1} parent=5 // pred_check
        _
      $region26: #{tpu_custom_call.1} parent=5 // pred_check_branch
        %136 = sbr.rel (%p133) target = $region28
      $region27: #{tpu_custom_call.1} parent=5 // pred_region
        %s137 = ssub.s32 %s14, 1
        %s138 = sand.u32 %s27, 1
        %s139 = scalar_lea.sflag [#allocation3], %s138
        %s140 = sand.u32 %s27, 1
        %s141 = smul.addr %s140, 128
        %s142 = scalar_lea.vmem [#allocation2], %s141
        // Predicated region
        $region29: #{tpu_custom_call.1} parent=27 // pred_check
          %p143 = pneg %p40
        $region30: #{tpu_custom_call.1} parent=27 // pred_check_branch
          %145 = sbr.rel (%p143) target = $region32
        $region31: #{tpu_custom_call.1} parent=27 // pred_region
          %146 = dma.done %s139, 2048
        $region32: #{tpu_custom_call.1} parent=27 // pred_fallthru
          _
        %s147 = sand.u32 %s27, 1
        %s148 = scalar_lea.sflag [#allocation3], %s147
        %s149 = sand.u32 %s27, 1
        %s150 = smul.addr %s149, 128
        %s151 = scalar_lea.vmem [#allocation2], %s150
        %p152 = pneg %p40
        %p153 = pneg %p37
        %p154 = pneg %p61
        %p155 = pneg %p58
        %p156 = pneg %p87
        %p157 = pneg %p84
        %s158 = sand.u32 %s74, 1
        %s159 = scalar_lea.sflag [#allocation4], %s158
        %s160 = sand.u32 %s74, 1
        %s161 = smul.addr %s160, 128
        %s162 = scalar_lea.vmem [#allocation5], %s161
        %s163 = smul.u32 8, %s19
        %s164 = smul.u32 8, %s19
        %v165 = vld [vmem:[%s142] sm:$0xff]
        %v166 = vld [vmem:[%s142 + $0x8] sm:$0xff]
        %v167 = vld [vmem:[%s142 + $0x10] sm:$0xff]
        %v168 = vld [vmem:[%s142 + $0x18] sm:$0xff]
        %v169 = vld [vmem:[%s142 + $0x20] sm:$0xff]
        %v170 = vld [vmem:[%s142 + $0x28] sm:$0xff]
        %v171 = vld [vmem:[%s142 + $0x30] sm:$0xff]
        %v172 = vld [vmem:[%s142 + $0x38] sm:$0xff]
        %v173 = vld [vmem:[%s142 + $0x40] sm:$0xff]
        %v174 = vld [vmem:[%s142 + $0x48] sm:$0xff]
        %v175 = vld [vmem:[%s142 + $0x50] sm:$0xff]
        %v176 = vld [vmem:[%s142 + $0x58] sm:$0xff]
        %v177 = vld [vmem:[%s142 + $0x60] sm:$0xff]
        %v178 = vld [vmem:[%s142 + $0x68] sm:$0xff]
        %v179 = vld [vmem:[%s142 + $0x70] sm:$0xff]
        %v180 = vld [vmem:[%s142 + $0x78] sm:$0xff]
        %v181 = vmul.f32 %v165, %v165
        %v182 = vmul.f32 %v166, %v166
        %v183 = vmul.f32 %v167, %v167
        %v184 = vmul.f32 %v168, %v168
        %v185 = vmul.f32 %v169, %v169
        %v186 = vmul.f32 %v170, %v170
        %v187 = vmul.f32 %v171, %v171
        %v188 = vmul.f32 %v172, %v172
        %v189 = vmul.f32 %v173, %v173
        %v190 = vmul.f32 %v174, %v174
        %v191 = vmul.f32 %v175, %v175
        %v192 = vmul.f32 %v176, %v176
        %v193 = vmul.f32 %v177, %v177
        %v194 = vmul.f32 %v178, %v178
        %v195 = vmul.f32 %v179, %v179
        %v196 = vmul.f32 %v180, %v180
        %v197 = vadd.f32 %v181, %v182
        %198 = vadd.xlane.f32.xlu0 %v197
        %v199 = vpop.xlane.xlu0 %198
        %v200 = vadd.f32 %v183, %v184
        %201 = vadd.xlane.f32.xlu0 %v200
        %v202 = vpop.xlane.xlu0 %201
        %v203 = vadd.f32 %v185, %v186
        %204 = vadd.xlane.f32.xlu0 %v203
        %v205 = vpop.xlane.xlu0 %204
        %v206 = vadd.f32 %v187, %v188
        %207 = vadd.xlane.f32.xlu0 %v206
        %v208 = vpop.xlane.xlu0 %207
        %v209 = vadd.f32 %v189, %v190
        %210 = vadd.xlane.f32.xlu0 %v209
        %v211 = vpop.xlane.xlu0 %210
        %v212 = vadd.f32 %v191, %v192
        %213 = vadd.xlane.f32.xlu0 %v212
        %v214 = vpop.xlane.xlu0 %213
        %v215 = vadd.f32 %v193, %v194
        %216 = vadd.xlane.f32.xlu0 %v215
        %v217 = vpop.xlane.xlu0 %216
        %v218 = vadd.f32 %v195, %v196
        %219 = vadd.xlane.f32.xlu0 %v218
        %v220 = vpop.xlane.xlu0 %219
        %v221 = vrcp.pop 256.0
        %v222 = vmul.f32 %v199, %v221
        %v223 = vmul.f32 %v202, %v221
        %v224 = vmul.f32 %v205, %v221
        %v225 = vmul.f32 %v208, %v221
        %v226 = vmul.f32 %v211, %v221
        %v227 = vmul.f32 %v214, %v221
        %v228 = vmul.f32 %v217, %v221
        %v229 = vmul.f32 %v220, %v221
        %v230 = vadd.f32 %v222, 1e-05
        %v231 = vadd.f32 %v223, 1e-05
        %v232 = vadd.f32 %v224, 1e-05
        %v233 = vadd.f32 %v225, 1e-05
        %v234 = vadd.f32 %v226, 1e-05
        %v235 = vadd.f32 %v227, 1e-05
        %v236 = vadd.f32 %v228, 1e-05
        %v237 = vadd.f32 %v229, 1e-05
        %v238 = vrsqrt.pop %v230
        %v239 = vrsqrt.pop %v231
        %v240 = vrsqrt.pop %v232
        %v241 = vrsqrt.pop %v233
        %v242 = vrsqrt.pop %v234
        %v243 = vrsqrt.pop %v235
        %v244 = vrsqrt.pop %v236
        %v245 = vrsqrt.pop %v237
        %v246 = vmul.f32 %v165, %v238
        %v247 = vmul.f32 %v166, %v238
        %v248 = vmul.f32 %v167, %v239
        %v249 = vmul.f32 %v168, %v239
        %v250 = vmul.f32 %v169, %v240
        %v251 = vmul.f32 %v170, %v240
        %v252 = vmul.f32 %v171, %v241
        %v253 = vmul.f32 %v172, %v241
        %v254 = vmul.f32 %v173, %v242
        %v255 = vmul.f32 %v174, %v242
        %v256 = vmul.f32 %v175, %v243
        %v257 = vmul.f32 %v176, %v243
        %v258 = vmul.f32 %v177, %v244
        %v259 = vmul.f32 %v178, %v244
        %v260 = vmul.f32 %v179, %v245
        %v261 = vmul.f32 %v180, %v245
        %v262 = vld [vmem:[%s1] sm:$0x3]
        %v264 = vlaneseq
        %v265 = vshrl.u32 %v264, 7
        %v266 = vsub.s32 0, %v265
        %v267 = vrot.slane %v262, %v266
        %v268 = vlaneseq
        %v269 = vshrl.u32 %v268, 7
        %v270 = vsub.s32 1, %v269
        %v271 = vrot.slane %v262, %v270
        %v274 = vmul.f32 %v267, %v246
        %v275 = vmul.f32 %v271, %v247
        %v276 = vmul.f32 %v267, %v248
        %v277 = vmul.f32 %v271, %v249
        %v278 = vmul.f32 %v267, %v250
        %v279 = vmul.f32 %v271, %v251
        %v280 = vmul.f32 %v267, %v252
        %v281 = vmul.f32 %v271, %v253
        %v282 = vmul.f32 %v267, %v254
        %v283 = vmul.f32 %v271, %v255
        %v284 = vmul.f32 %v267, %v256
        %v285 = vmul.f32 %v271, %v257
        %v286 = vmul.f32 %v267, %v258
        %v287 = vmul.f32 %v271, %v259
        %v288 = vmul.f32 %v267, %v260
        %v289 = vmul.f32 %v271, %v261
        %290 = vst [vmem:[%s162] sm:$0xff] %v274
        %291 = vst [vmem:[%s162 + $0x8] sm:$0xff] %v275
        %292 = vst [vmem:[%s162 + $0x10] sm:$0xff] %v276
        %293 = vst [vmem:[%s162 + $0x18] sm:$0xff] %v277
        %294 = vst [vmem:[%s162 + $0x20] sm:$0xff] %v278
        %295 = vst [vmem:[%s162 + $0x28] sm:$0xff] %v279
        %296 = vst [vmem:[%s162 + $0x30] sm:$0xff] %v280
        %297 = vst [vmem:[%s162 + $0x38] sm:$0xff] %v281
        %298 = vst [vmem:[%s162 + $0x40] sm:$0xff] %v282
        %299 = vst [vmem:[%s162 + $0x48] sm:$0xff] %v283
        %300 = vst [vmem:[%s162 + $0x50] sm:$0xff] %v284
        %301 = vst [vmem:[%s162 + $0x58] sm:$0xff] %v285
        %302 = vst [vmem:[%s162 + $0x60] sm:$0xff] %v286
        %303 = vst [vmem:[%s162 + $0x68] sm:$0xff] %v287
        %304 = vst [vmem:[%s162 + $0x70] sm:$0xff] %v288
        %305 = vst [vmem:[%s162 + $0x78] sm:$0xff] %v289
        %s306 = sand.u32 %s74, 1
        %s307 = scalar_lea.sflag [#allocation4], %s306
        %s308 = sand.u32 %s74, 1
        %s309 = smul.addr %s308, 128
        %s310 = scalar_lea.vmem [#allocation5], %s309
        // Predicated region
        $region33: #{tpu_custom_call.1} parent=27 // pred_check
          %p311 = pneg %p84
        $region34: #{tpu_custom_call.1} parent=27 // pred_check_branch
          %313 = sbr.rel (%p311) target = $region36
        $region35: #{tpu_custom_call.1} parent=27 // pred_region
          %s314 = smul.u32 8, %s19
          %s316 = ssub.s32 2048, 2048
          %317 = vsyncadd %s307, %s316
          %s318 = smul.addr %s314, 2
          %s319 = smul.addr %s318, 128
          %s320 = scalar_lea.hbm %s2, %s319
          %s321 = sshll.u32 %s310, 4
          %s322 = int_to_ptr.vmem [resolvable:$true] %s321
          %327 = dma.vmem_to_hbm [thread:$0]  %s322, 2048, %s320, %s307, 256, 256, 16
        $region36: #{tpu_custom_call.1} parent=27 // pred_fallthru
          _
      $region28: #{tpu_custom_call.1} parent=5 // pred_fallthru
        _
      %p328 = scmp.le.s32.totalorder 2, %s14
      // Predicated region
      $region37: #{tpu_custom_call.1} parent=5 // pred_check
        %p329 = pneg %p328
      $region38: #{tpu_custom_call.1} parent=5 // pred_check_branch
        %331 = sbr.rel (%p329) target = $region40
      $region39: #{tpu_custom_call.1} parent=5 // pred_region
        %s332 = ssub.s32 %s14, 2
        // Predicated region
        $region41: #{tpu_custom_call.1} parent=39 // pred_check
          %p333 = pneg %p90
        $region42: #{tpu_custom_call.1} parent=39 // pred_check_branch
          %335 = sbr.rel (%p333) target = $region44
        $region43: #{tpu_custom_call.1} parent=39 // pred_region
          %s336 = sand.u32 %s75, 1
          %s337 = scalar_lea.sflag [#allocation4], %s336
          %s338 = sand.u32 %s75, 1
          %s339 = smul.addr %s338, 128
          %s340 = scalar_lea.vmem [#allocation5], %s339
          %341 = dma.done %s337, 2048
        $region44: #{tpu_custom_call.1} parent=39 // pred_fallthru
          _
      $region40: #{tpu_custom_call.1} parent=5 // pred_fallthru
        _
    $region6: #{tpu_custom_call.1} parent=1 // loop_footer
      %s18 = sadd.s32 1, %s14
    $region7: #{tpu_custom_call.1} parent=1 // loop_footer_branch
      %13 = sbr.rel target = $region3
    $region8: #{tpu_custom_call.1} parent=1 // loop_exit
      _
    %342 = vsyncpa [#allocation3], 1
    %s343 = scalar_lea.sflag [#allocation3], 1
    %344 = vsyncpa %s343, 1
    %345 = vsyncpa [#allocation4], 1
    %s346 = scalar_lea.sflag [#allocation4], 1
    %347 = vsyncpa %s346, 1

</llo_original>
